<compile_context>
chip_gen: v6e
topology: v6e:2x2x1
jax: 0.10.0
libtpu: 0.0.40
codegen_flags: <defaults>
</compile_context>

<pallas_src>
import functools

import jax
import jax.numpy as jnp
from jax.experimental import pallas as pl
from jax.experimental.pallas import tpu as pltpu


def _simple_ann_kernel(x_ref, w_ref, b_ref, o_ref):
    # x_ref: (TB2, 128) f32 VMEM tile; each physical row packs two logical
    #        64-feature rows (row 2i in lanes 0..63, row 2i+1 in lanes 64..127).
    # w_ref: (1, 128) f32 VMEM, weight row tiled twice, resident across grid.
    # b_ref: (1, 1)   f32 SMEM scalar.
    # o_ref: (TB2, 2) f32; column 0 = even logical rows, column 1 = odd rows.
    half = x_ref.shape[-1] // 2                      # 64
    p = x_ref[...] * w_ref[...]                      # full-width VPU multiply
    b = b_ref[0, 0]
    # Segmented 64-lane reduces (XLU), one per packed logical row.
    ya = jnp.sum(p[:, :half], axis=-1, keepdims=True) + b
    yb = jnp.sum(p[:, half:], axis=-1, keepdims=True) + b
    o_ref[:, 0:1] = jnp.tanh(ya).astype(o_ref.dtype)
    o_ref[:, 1:2] = jnp.tanh(yb).astype(o_ref.dtype)


def _round_up(n, m):
    return ((n + m - 1) // m) * m


@functools.partial(jax.jit, static_argnames=("block_b",))
def simple_ann_forward(x, weight, bias, *, block_b=16384):
    """x: (B, 64) f32; weight: (1, 64) f32 (PyTorch layout); bias: (1,) f32."""
    B, D = x.shape
    assert D == 64

    x = x.astype(jnp.float32)
    if B % 2 != 0:
        # Odd batch: pad a single row so the lane-dense pairing is valid.
        # (Only this rare case pays a copy; even batches are a free reshape.)
        x = jnp.pad(x, ((0, 1), (0, 0)))
    b_pairs_total = x.shape[0] // 2
    x2 = x.reshape(b_pairs_total, 2 * D)             # (B//2, 128), lane-dense

    w_row = jnp.tile(weight.reshape(1, D).astype(jnp.float32), (1, 2))  # (1,128)
    b_smem = bias.reshape(1, 1).astype(jnp.float32)                     # SMEM

    # Tile over packed rows: block_b logical rows == block_b//2 packed rows.
    tb2 = _round_up(min(block_b // 2, b_pairs_total), 8)
    nb = pl.cdiv(b_pairs_total, tb2)

    cost = pl.CostEstimate(
        flops=2 * B * D,
        transcendentals=B,
        bytes_accessed=B * D * 4 + B * 4 + (2 * D + 1) * 4,
    )

    out2 = pl.pallas_call(
        _simple_ann_kernel,
        out_shape=jax.ShapeDtypeStruct((b_pairs_total, 2), jnp.float32),
        grid_spec=pltpu.PrefetchScalarGridSpec(
            num_scalar_prefetch=0,
            grid=(nb,),
            in_specs=[
                # x: tiled over packed rows -> double-buffered streaming DMA;
                # last block is clipped by Pallas (no wrapper pad needed).
                pl.BlockSpec((tb2, 2 * D), lambda i: (i, 0)),
                # weight row: constant index map -> resident in VMEM.
                pl.BlockSpec((1, 2 * D), lambda i: (0, 0)),
                # bias: scalar in SMEM.
                pl.BlockSpec(memory_space=pltpu.MemorySpace.SMEM),
            ],
            out_specs=pl.BlockSpec((tb2, 2), lambda i: (i, 0)),
        ),
        compiler_params=pltpu.CompilerParams(
            dimension_semantics=("parallel",),
            # ~2x4 MiB (x, double-buffered) + ~2x4 MiB (lane-padded out block)
            # at the default tile; 40 MiB gives headroom on v5e/v6e/v7x.
            vmem_limit_bytes=40 * 1024 * 1024,
        ),
        cost_estimate=cost,
    )(x2, w_row, b_smem)

    # Row-major flatten restores original row order: [y0, y1, y2, ...].
    out = out2.reshape(-1, 1)
    return out[:B]


def reference_forward(x, weight, bias):
    # Pure-f32 elementwise reference (avoids TPU default-precision matmul).
    return jnp.tanh(jnp.sum(x * weight.reshape(1, -1), axis=-1, keepdims=True) + bias)


if __name__ == "__main__":
    key = jax.random.PRNGKey(0)
    kx, kw, kb, kx2, kx3 = jax.random.split(key, 5)

    in_features = 8 * 8  # 64

    # Deterministic parameter init (shapes per nn.Linear(64, 1)).
    bound = 1.0 / jnp.sqrt(jnp.float32(in_features))
    weight = jax.random.uniform(kw, (1, in_features), jnp.float32, -bound, bound)
    bias = jax.random.uniform(kb, (1,), jnp.float32, -bound, bound)

    # Case 1: small even batch (single partial tile, block bigger than array).
    batch = 10
    x = jax.random.normal(kx, (batch, in_features), jnp.float32)
    out = jax.block_until_ready(simple_ann_forward(x, weight, bias))
    ref = reference_forward(x, weight, bias)
    assert out.shape == (batch, 1)
    assert jnp.allclose(out, ref, atol=1e-5, rtol=1e-5)

    # Case 2: multi-tile grid with a partial last tile (small block_b so the
    # pipelined grid path is exercised at a tiny problem size).
    batch2 = 300
    x2 = jax.random.normal(kx2, (batch2, in_features), jnp.float32)
    out2 = jax.block_until_ready(simple_ann_forward(x2, weight, bias, block_b=128))
    ref2 = reference_forward(x2, weight, bias)
    assert out2.shape == (batch2, 1)
    assert jnp.allclose(out2, ref2, atol=1e-5, rtol=1e-5)

    # Case 3: odd batch (exercises the one-row pad fallback).
    batch3 = 11
    x3 = jax.random.normal(kx3, (batch3, in_features), jnp.float32)
    out3 = jax.block_until_ready(simple_ann_forward(x3, weight, bias))
    ref3 = reference_forward(x3, weight, bias)
    assert out3.shape == (batch3, 1)
    assert jnp.allclose(out3, ref3, atol=1e-5, rtol=1e-5)

    print("KERNEL_OK")
</pallas_src>

<mosaic_0001>
module attributes {stable_mosaic.version = 11 : i64} {
  func.func @_simple_ann_kernel(%arg0: i32, %arg1: memref<8x128xf32, #tpu.memory_space<vmem>>, %arg2: memref<1x128xf32, #tpu.memory_space<vmem>>, %arg3: memref<1x1xf32, #tpu.memory_space<smem>>, %arg4: memref<8x2xf32, #tpu.memory_space<vmem>>) attributes {dimension_semantics = [#tpu.dimension_semantics<parallel>], iteration_bounds = array<i64: 1>, scalar_prefetch = 0 : i64, scratch_operands = 0 : i64, tpu.core_type = #tpu.core_type<tc>, window_params = [{transform_indices = @transform_0, window_bounds = array<i64: 8, 128>}, {pipeline_mode = #tpu.pipeline_mode<synchronous>, transform_indices = @transform_1, window_bounds = array<i64: 1, 128>}, {transform_indices = @transform_2, window_bounds = array<i64: 1, 1>}, {transform_indices = @transform_3, window_bounds = array<i64: 8, 2>}]} {
    %c0 = arith.constant 0 : index
    %c0_0 = arith.constant 0 : index
    %0 = vector.load %arg1[%c0, %c0_0] : memref<8x128xf32, #tpu.memory_space<vmem>>, vector<8x128xf32>
    %c0_1 = arith.constant 0 : index
    %c0_2 = arith.constant 0 : index
    %1 = vector.load %arg2[%c0_1, %c0_2] : memref<1x128xf32, #tpu.memory_space<vmem>>, vector<1x128xf32>
    %2 = vector.broadcast %1 : vector<1x128xf32> to vector<8x128xf32>
    %3 = arith.mulf %0, %2 : vector<8x128xf32>
    %c0_3 = arith.constant 0 : index
    %c0_4 = arith.constant 0 : index
    %4 = memref.load %arg3[%c0_3, %c0_4] : memref<1x1xf32, #tpu.memory_space<smem>>
    %5 = vector.extract_strided_slice %3 {offsets = [0, 0], sizes = [8, 64], strides = [1, 1]} : vector<8x128xf32> to vector<8x64xf32>
    %cst = arith.constant dense<0.000000e+00> : vector<8xf32>
    %6 = vector.multi_reduction <add>, %5, %cst [1] : vector<8x64xf32> to vector<8xf32>
    %7 = vector.shape_cast %6 : vector<8xf32> to vector<8x1xf32>
    %8 = vector.broadcast %4 : f32 to vector<8x1xf32>
    %9 = arith.addf %7, %8 : vector<8x1xf32>
    %10 = vector.extract_strided_slice %3 {offsets = [0, 64], sizes = [8, 64], strides = [1, 1]} : vector<8x128xf32> to vector<8x64xf32>
    %cst_5 = arith.constant dense<0.000000e+00> : vector<8xf32>
    %11 = vector.multi_reduction <add>, %10, %cst_5 [1] : vector<8x64xf32> to vector<8xf32>
    %12 = vector.shape_cast %11 : vector<8xf32> to vector<8x1xf32>
    %13 = vector.broadcast %4 : f32 to vector<8x1xf32>
    %14 = arith.addf %12, %13 : vector<8x1xf32>
    %15 = math.tanh %9 : vector<8x1xf32>
    %c0_6 = arith.constant 0 : index
    %c0_7 = arith.constant 0 : index
    %16 = vector.load %arg4[%c0_6, %c0_7] : memref<8x2xf32, #tpu.memory_space<vmem>>, vector<8x1xf32>
    tpu.vector_store %arg4[%c0_6, %c0_7], %15 {strides = array<i32>} : memref<8x2xf32, #tpu.memory_space<vmem>>, vector<8x1xf32>,
    %17 = math.tanh %14 : vector<8x1xf32>
    %c0_8 = arith.constant 0 : index
    %c1 = arith.constant 1 : index
    %18 = vector.load %arg4[%c0_8, %c1] : memref<8x2xf32, #tpu.memory_space<vmem>>, vector<8x1xf32>
    tpu.vector_store %arg4[%c0_8, %c1], %17 {strides = array<i32>} : memref<8x2xf32, #tpu.memory_space<vmem>>, vector<8x1xf32>,
    return
  }
  func.func @transform_0(%arg0: i32) -> (i32, i32) {
    %c0_i32 = arith.constant 0 : i32
    %c0_i32_0 = arith.constant 0 : i32
    return %arg0, %c0_i32 : i32, i32
  }
  func.func @transform_1(%arg0: i32) -> (i32, i32) {
    %c0_i32 = arith.constant 0 : i32
    %c0_i32_0 = arith.constant 0 : i32
    %c0_i32_1 = arith.constant 0 : i32
    return %c0_i32, %c0_i32_0 : i32, i32
  }
  func.func @transform_2(%arg0: i32) -> (i32, i32) {
    %c0_i32 = arith.constant 0 : i32
    %c0_i32_0 = arith.constant 0 : i32
    %c0_i32_1 = arith.constant 0 : i32
    return %c0_i32, %c0_i32_0 : i32, i32
  }
  func.func @transform_3(%arg0: i32) -> (i32, i32) {
    %c0_i32 = arith.constant 0 : i32
    %c0_i32_0 = arith.constant 0 : i32
    return %arg0, %c0_i32 : i32, i32
  }
}

</mosaic_0001>

<llo_original>
// kernel: simple_ann_forward.1
$region0: #{simple_ann_forward.1}
  #allocation0 [shape = 'u32[]', space=smem, size = 0x4, offset = 0x4, fixed_abs, tag = 'smem constant byte address 0x4 - core index']
  #allocation1 [shape = 'u32[144,128]{1,0:T(1,128)}', space=vmem, size = 0x12000, scoped, tag = 'internal scratch']
  #allocation2 [shape = 'f32[1,1]{1,0:T(1,128)S(6)}', space=smem, size = 0x200, scoped, tag = 'scoped memory for simple_ann_forward.1']
  %s0 = inlined_call_operand.vmem [shape: f32[5,128], index: 0, kind: input, shape index: {}]
  %s1 = inlined_call_operand.vmem [shape: f32[1,128], index: 1, kind: input, shape index: {}]
  %s2 = inlined_call_operand.<no memory space> [shape: f32[1,1], index: 2, kind: input, shape index: {}]
  %s3 = inlined_call_operand.vmem [shape: f32[5,2], index: 3, kind: output, shape index: {}]
  %s4 = sld [smem:[#allocation0]]
  $region22: #{simple_ann_forward.1} parent=0
    _
  %s6 = ssub.s32 1, %s4
  %s7 = scalar_select 0, %s6, %s4
  %8 = sst [smem:[#allocation2]] %s2
  // Predicated region
  $region2: #{simple_ann_forward.1} parent=0 // pred_check
    _
  $region3: #{simple_ann_forward.1} parent=0 // pred_check_branch
    %10 = sbr.rel (0) target = $region5
  $region4: #{simple_ann_forward.1} parent=0 // pred_region
    _
  $region5: #{simple_ann_forward.1} parent=0 // pred_fallthru
    _
  // Predicated region
  $region6: #{simple_ann_forward.1} parent=0 // pred_check
    _
  $region7: #{simple_ann_forward.1} parent=0 // pred_check_branch
    %12 = sbr.rel (0) target = $region9
  $region8: #{simple_ann_forward.1} parent=0 // pred_region
    _
  $region9: #{simple_ann_forward.1} parent=0 // pred_fallthru
    _
  // Predicated region
  $region10: #{simple_ann_forward.1} parent=0 // pred_check
    _
  $region11: #{simple_ann_forward.1} parent=0 // pred_check_branch
    %14 = sbr.rel (0) target = $region13
  $region12: #{simple_ann_forward.1} parent=0 // pred_region
    _
  $region13: #{simple_ann_forward.1} parent=0 // pred_fallthru
    _
  %v15 = vld [vmem:[%s0] sm:$0xff]
  %v16 = vld [vmem:[%s1] sm:$0x1]
  %v18 = vlaneseq
  %v19 = vshrl.u32 %v18, 7
  %v20 = vsub.s32 0, %v19
  %v21 = vrot.slane %v16, %v20
  %v23 = vmul.f32 %v15, %v21
  %s24 = sld [smem:[#allocation2]]
  %vm25 = vcmask 523264
  %v26 = vsel %vm25, %v23, 0.0
  %27 = vadd.xlane.f32.xlu0 %v26
  %v28 = vpop.xlane.xlu0 %27
  %v29 = vstv %s24
  %v30 = vadd.f32 %v28, %v29
  %32 = vrot.lane.b32.xlu0 %v23, 64
  %v33 = vpop.permute.xlu0 %32
  %v35 = vsel %vm25, %v33, 0.0
  %36 = vadd.xlane.f32.xlu0 %v35
  %v37 = vpop.xlane.xlu0 %36
  %v38 = vadd.f32 %v37, %v29
  %v39 = vtanh.pop %v30
  %vm40 = vcmask 7168
  %41 = vst.msk [vmem:[%s3] sm:$0xff] %vm40, %v39
  %v42 = vtanh.pop %v38
  %vm43 = vcmask 15368
  %44 = vst.msk [vmem:[%s3] sm:$0xff] %vm43, %v42
  // Predicated region
  $region14: #{simple_ann_forward.1} parent=0 // pred_check
    _
  $region15: #{simple_ann_forward.1} parent=0 // pred_check_branch
    %46 = sbr.rel (0) target = $region17
  $region16: #{simple_ann_forward.1} parent=0 // pred_region
    _
  $region17: #{simple_ann_forward.1} parent=0 // pred_fallthru
    _
  // Predicated region
  $region18: #{simple_ann_forward.1} parent=0 // pred_check
    _
  $region19: #{simple_ann_forward.1} parent=0 // pred_check_branch
    %48 = sbr.rel (0) target = $region21
  $region20: #{simple_ann_forward.1} parent=0 // pred_region
    _
  $region21: #{simple_ann_forward.1} parent=0 // pred_fallthru
    _

</llo_original>
